<compile_context>
chip_gen: v6e
topology: v6e:2x2x1
jax: 0.10.0
libtpu: 0.0.40
codegen_flags: <defaults>
</compile_context>

<pallas_src>
from functools import partial

import jax
import jax.numpy as jnp
from jax import lax
from jax.experimental import pallas as pl
from jax.experimental.pallas import tpu as pltpu


# ---------------------------------------------------------------------------
# Planning helpers (byte-sized tiles, footprint-derived VMEM limit)
# ---------------------------------------------------------------------------

# ~0.35 us per grid step => 2-4 MiB streaming blocks sit at ~90%+ of HBM roofline.
_TARGET_BLOCK_BYTES = 4 << 20          # f32-equivalent bytes per input block
_PACKED_TARGET_BLOCK_BYTES = 2 << 20   # packed path has a larger in-kernel working set


def _has_bf16_vpu():
    """v6e/v7x have bf16 VALUs; v5e (and older) do not — keep f32 affine there."""
    try:
        kind = jax.devices()[0].device_kind.lower()
    except Exception:
        return False
    return not any(tag in kind for tag in ("v2", "v3", "v4", "v5"))


def _vmem_limit(block_elems, itemsize, f32_copies):
    """VMEM request derived from the actual footprint: double-buffered in+out blocks
    in native dtype + a few f32 working copies + margin for Mosaic internal scratch.
    Clamped well under v7x's 64 MiB/TC."""
    io = 4 * block_elems * itemsize            # (in + out) x double buffering
    work = f32_copies * block_elems * 4        # in-kernel f32 upcast / intermediates
    return int(min(max(io + work + (8 << 20), 16 << 20), 40 << 20))


def _pick_row_tile(rows, width, itemsize, target_bytes):
    """Row tile for a (rows, width) block, sized by bytes (f32-equivalent), multiple
    of 8 sublanes unless the full extent is taken."""
    eff = max(itemsize, 4)                     # budget the in-kernel f32 upcast
    tm = target_bytes // max(1, width * eff)
    if tm >= rows:
        return rows                            # single full-extent block
    return max(8, (tm // 8) * 8)               # tail handled by cdiv-padded block


def _pick_packed_row_tile(rows, itemsize):
    """Row tile for the lane-dense packed path (width fixed at 128). Always a multiple
    of 8 so the MXU matmul M-dim stays sublane-aligned (tails padded by Pallas)."""
    eff = max(itemsize, 4)
    tm = _PACKED_TARGET_BLOCK_BYTES // (128 * eff)
    return max(8, (min(tm, rows) // 8) * 8)


def _plan_channels_first(n, c, hw, itemsize, target_bytes):
    """(nb, t): batch fold and spatial tile for (N, C, HW) channels_first blocks."""
    eff = max(itemsize, 4)
    per_col = max(1, c * eff)                  # f32-equiv bytes per spatial position
    t = target_bytes // per_col
    if t < hw:
        t = max(128, (t // 128) * 128)         # keep stores lane-aligned
        return 1, min(t, hw)
    # Whole spatial extent fits: fold several images per grid step to amortize the
    # per-step overhead and DMA descriptor cost.
    nb = min(max(1, t // hw), n)
    return nb, hw


# ---------------------------------------------------------------------------
# Kernels
# ---------------------------------------------------------------------------

def _ln_reduce_kernel(x_ref, w_ref, b_ref, o_ref, *, eps, inv_n, axis, bf16_affine):
    """LayerNorm with the reduction over `axis` of the loaded block.
    axis=-1: (tm, C) channels_last rows; axis=-2: (nb, C, t) channels_first."""
    xin = x_ref[...]
    xf = xin.astype(jnp.float32)
    # Single-pass statistics: both reductions issued directly off the loaded tile.
    mean = jnp.sum(xf, axis=axis, keepdims=True) * inv_n
    ex2 = jnp.sum(xf * xf, axis=axis, keepdims=True) * inv_n
    var = jnp.maximum(ex2 - mean * mean, 0.0)   # biased variance, guarded >= 0
    inv = lax.rsqrt(var + eps)                  # EUP slot — effectively free
    if bf16_affine:
        # v6e/v7x with bf16 I/O: halve VALU + vld/vst pressure; stats stay f32.
        cd = jnp.bfloat16
        o_ref[...] = ((xin.astype(cd) - mean.astype(cd)) * inv.astype(cd)
                      * w_ref[...].astype(cd) + b_ref[...].astype(cd)).astype(o_ref.dtype)
    else:
        o_ref[...] = ((xf - mean) * inv * w_ref[...].astype(jnp.float32)
                      + b_ref[...].astype(jnp.float32)).astype(o_ref.dtype)


def _ln_packed_kernel(x_ref, w_ref, b_ref, seg_ref, o_ref, *, eps, inv_n, bf16_affine):
    """Lane-dense channels_last for small C: block is (tm, 128) holding g = 128//C
    original rows per packed row. Per-group statistics are computed (and broadcast
    back to every lane of the group) with a block-diagonal 0/1 MXU matmul; an
    explicit hi/lo bf16 split keeps the sums ~f32 accurate."""
    xin = x_ref[...]                            # (tm, 128)
    xf = xin.astype(jnp.float32)
    seg = seg_ref[...]                          # (128, 128) bf16 block-diagonal of 1s

    def group_sum(v):
        hi = v.astype(jnp.bfloat16)
        lo = (v - hi.astype(jnp.float32)).astype(jnp.bfloat16)
        return (jnp.dot(hi, seg, preferred_element_type=jnp.float32)
                + jnp.dot(lo, seg, preferred_element_type=jnp.float32))

    mean = group_sum(xf) * inv_n                # per-group mean, already broadcast
    ex2 = group_sum(xf * xf) * inv_n
    var = jnp.maximum(ex2 - mean * mean, 0.0)
    inv = lax.rsqrt(var + eps)
    if bf16_affine:
        cd = jnp.bfloat16
        o_ref[...] = ((xin.astype(cd) - mean.astype(cd)) * inv.astype(cd)
                      * w_ref[...].astype(cd) + b_ref[...].astype(cd)).astype(o_ref.dtype)
    else:
        o_ref[...] = ((xf - mean) * inv * w_ref[...].astype(jnp.float32)
                      + b_ref[...].astype(jnp.float32)).astype(o_ref.dtype)


# ---------------------------------------------------------------------------
# Wrappers
# ---------------------------------------------------------------------------

def _layer_norm_rows_packed(x2d, weight, bias, eps, bf16_affine, g):
    """channels_last, C < 128 with C | 128: lane-dense packed path."""
    R, C = x2d.shape
    itemsize = x2d.dtype.itemsize
    gc = g * C                                  # == 128: unmasked, lane-dense stores
    rows_p = R // g
    xp = x2d.reshape(rows_p, gc)                # free trailing-dim merge (contiguous)
    tm = _pick_packed_row_tile(rows_p, itemsize)
    grid = (pl.cdiv(rows_p, tm),)

    wp = jnp.tile(weight, g).reshape(1, gc)
    bp = jnp.tile(bias, g).reshape(1, gc)
    lane = jnp.arange(gc, dtype=jnp.int32)
    seg = (lane[:, None] // C == lane[None, :] // C).astype(jnp.bfloat16)

    yp = pl.pallas_call(
        partial(_ln_packed_kernel, eps=eps, inv_n=1.0 / C, bf16_affine=bf16_affine),
        out_shape=jax.ShapeDtypeStruct((rows_p, gc), x2d.dtype),
        grid_spec=pltpu.PrefetchScalarGridSpec(
            num_scalar_prefetch=0,
            grid=grid,
            in_specs=[
                pl.BlockSpec((tm, gc), lambda i: (i, 0)),
                pl.BlockSpec((1, gc), lambda i: (0, 0)),
                pl.BlockSpec((1, gc), lambda i: (0, 0)),
                pl.BlockSpec((gc, gc), lambda i: (0, 0)),
            ],
            out_specs=pl.BlockSpec((tm, gc), lambda i: (i, 0)),
        ),
        compiler_params=pltpu.CompilerParams(
            dimension_semantics=("parallel",),
            vmem_limit_bytes=_vmem_limit(tm * gc, itemsize, 6)),
    )(xp, wp, bp, seg)
    return yp.reshape(R, C)


def _layer_norm_rows(x2d, weight, bias, eps, bf16_affine):
    """channels_last: LayerNorm over the last dim of a (R, C) array."""
    R, C = x2d.shape
    itemsize = x2d.dtype.itemsize

    g = (128 // C) if (C < 128 and 128 % C == 0) else 1
    if g > 1 and R % g == 0 and (R // g) >= 8:
        return _layer_norm_rows_packed(x2d, weight, bias, eps, bf16_affine, g)

    # Plain layout: block last dim = full C (required for the per-row reduce).
    tm = _pick_row_tile(R, C, itemsize, _TARGET_BLOCK_BYTES)
    grid = (pl.cdiv(R, tm),)                    # padded tail block: rows independent
    w2d = weight.reshape(1, C)
    b2d = bias.reshape(1, C)

    return pl.pallas_call(
        partial(_ln_reduce_kernel, eps=eps, inv_n=1.0 / C, axis=-1,
                bf16_affine=bf16_affine),
        out_shape=jax.ShapeDtypeStruct((R, C), x2d.dtype),
        grid_spec=pltpu.PrefetchScalarGridSpec(
            num_scalar_prefetch=0,
            grid=grid,
            in_specs=[
                pl.BlockSpec((tm, C), lambda i: (i, 0)),
                pl.BlockSpec((1, C), lambda i: (0, 0)),
                pl.BlockSpec((1, C), lambda i: (0, 0)),
            ],
            out_specs=pl.BlockSpec((tm, C), lambda i: (i, 0)),
        ),
        compiler_params=pltpu.CompilerParams(
            dimension_semantics=("parallel",),
            vmem_limit_bytes=_vmem_limit(tm * C, itemsize, 2)),
    )(x2d, w2d, b2d)


def _layer_norm_channels_first(x, weight, bias, eps, bf16_affine):
    """channels_first: normalize NCHW over C without any XLA transpose.

    x is viewed as (N, C, H*W); the kernel reduces over the sublane (C) axis and keeps
    H*W on lanes (lane-dense stores). Multiple batch images are folded per grid step
    when the per-image block would be small."""
    N, C, H, W = x.shape
    HW = H * W
    itemsize = x.dtype.itemsize
    x3d = x.reshape(N, C, HW)                   # trailing-dim merge: no data movement
    nb, t = _plan_channels_first(N, C, HW, itemsize, _TARGET_BLOCK_BYTES)
    grid = (pl.cdiv(N, nb), pl.cdiv(HW, t))     # padded tails: positions independent
    w3d = weight.reshape(1, C, 1)
    b3d = bias.reshape(1, C, 1)

    y3d = pl.pallas_call(
        partial(_ln_reduce_kernel, eps=eps, inv_n=1.0 / C, axis=-2,
                bf16_affine=bf16_affine),
        out_shape=jax.ShapeDtypeStruct((N, C, HW), x.dtype),
        grid_spec=pltpu.PrefetchScalarGridSpec(
            num_scalar_prefetch=0,
            grid=grid,
            in_specs=[
                pl.BlockSpec((nb, C, t), lambda n, j: (n, 0, j)),
                pl.BlockSpec((1, C, 1), lambda n, j: (0, 0, 0)),
                pl.BlockSpec((1, C, 1), lambda n, j: (0, 0, 0)),
            ],
            out_specs=pl.BlockSpec((nb, C, t), lambda n, j: (n, 0, j)),
        ),
        compiler_params=pltpu.CompilerParams(
            dimension_semantics=("parallel", "parallel"),
            vmem_limit_bytes=_vmem_limit(nb * C * t, itemsize, 2)),
    )(x3d, w3d, b3d)
    return y3d.reshape(N, C, H, W)


class LayerNormPallas:
    """JAX/Pallas port of the PyTorch LayerNorm module."""

    def __init__(self, normalized_shape, eps=1e-06, data_format='channels_last'):
        if data_format not in ['channels_last', 'channels_first']:
            raise NotImplementedError
        self.eps = eps
        self.data_format = data_format
        self.normalized_shape = (normalized_shape,)
        # deterministic init identical to the torch module: ones / zeros
        self.weight = jnp.ones((normalized_shape,), dtype=jnp.float32)
        self.bias = jnp.zeros((normalized_shape,), dtype=jnp.float32)

    def __call__(self, x):
        # bf16 affine only where the VPU has bf16 (v6e/v7x); stats are always f32.
        bf16_affine = (x.dtype == jnp.bfloat16) and _has_bf16_vpu()
        if self.data_format == 'channels_last':
            C = x.shape[-1]
            assert C == self.normalized_shape[0]
            lead = x.shape[:-1]
            x2d = x.reshape(-1, C)
            y2d = _layer_norm_rows(x2d, self.weight, self.bias, self.eps, bf16_affine)
            return y2d.reshape(*lead, C)
        else:  # channels_first, NCHW — transpose-free, handled in-kernel
            N, C, H, W = x.shape
            assert C == self.normalized_shape[0]
            return _layer_norm_channels_first(x, self.weight, self.bias, self.eps,
                                              bf16_affine)


# ---------------------------------------------------------------------------
# References + self-check
# ---------------------------------------------------------------------------

def _ref_channels_last(x, w, b, eps):
    mean = jnp.mean(x, axis=-1, keepdims=True)
    var = jnp.mean((x - mean) ** 2, axis=-1, keepdims=True)
    return (x - mean) / jnp.sqrt(var + eps) * w + b


def _ref_channels_first(x, w, b, eps):
    u = jnp.mean(x, axis=1, keepdims=True)
    s = jnp.mean((x - u) ** 2, axis=1, keepdims=True)
    xn = (x - u) / jnp.sqrt(s + eps)
    return w[None, :, None, None] * xn + b[None, :, None, None]


if __name__ == "__main__":
    key = jax.random.PRNGKey(0)
    k1, k2, k3 = jax.random.split(key, 3)

    # channels_first: NCHW input, normalize over C (batch-folded, transpose-free path)
    x_cf = jax.random.normal(k1, (2, 4, 16, 16), dtype=jnp.float32)
    ln_cf = LayerNormPallas(4, eps=1e-6, data_format='channels_first')
    ln_cf.weight = jnp.arange(1, 5, dtype=jnp.float32) * 0.5
    ln_cf.bias = jnp.arange(4, dtype=jnp.float32) * 0.1
    y_cf = jax.block_until_ready(ln_cf(x_cf))
    y_cf_ref = _ref_channels_first(x_cf, ln_cf.weight, ln_cf.bias, 1e-6)

    # channels_last, C=32 (< 128, divides 128): exercises the lane-dense packed path
    x_cl = jax.random.normal(k2, (2, 16, 32), dtype=jnp.float32)
    ln_cl = LayerNormPallas(32, eps=1e-6, data_format='channels_last')
    ln_cl.weight = jnp.linspace(0.5, 1.5, 32, dtype=jnp.float32)
    ln_cl.bias = jnp.linspace(-0.1, 0.1, 32, dtype=jnp.float32)
    y_cl = jax.block_until_ready(ln_cl(x_cl))
    y_cl_ref = _ref_channels_last(x_cl, ln_cl.weight, ln_cl.bias, 1e-6)

    # channels_last, C=96 (128 % 96 != 0): exercises the plain-rows fallback path
    x_cl2 = jax.random.normal(k3, (2, 8, 96), dtype=jnp.float32)
    ln_cl2 = LayerNormPallas(96, eps=1e-6, data_format='channels_last')
    ln_cl2.weight = jnp.linspace(0.5, 1.5, 96, dtype=jnp.float32)
    ln_cl2.bias = jnp.linspace(-0.1, 0.1, 96, dtype=jnp.float32)
    y_cl2 = jax.block_until_ready(ln_cl2(x_cl2))
    y_cl2_ref = _ref_channels_last(x_cl2, ln_cl2.weight, ln_cl2.bias, 1e-6)

    assert y_cf.shape == x_cf.shape
    assert y_cl.shape == x_cl.shape
    assert y_cl2.shape == x_cl2.shape
    # Tolerance covers f32 reduction-order / single-pass-variance / hi-lo split
    # differences vs the XLA reference; well within layer-norm numerical expectations.
    assert jnp.allclose(y_cf, y_cf_ref, atol=1e-4, rtol=1e-4), "channels_first mismatch"
    assert jnp.allclose(y_cl, y_cl_ref, atol=1e-4, rtol=1e-4), "channels_last (packed) mismatch"
    assert jnp.allclose(y_cl2, y_cl2_ref, atol=1e-4, rtol=1e-4), "channels_last (plain) mismatch"

    print("KERNEL_OK")
</pallas_src>

<mosaic_0001>
module attributes {stable_mosaic.version = 11 : i64} {
  func.func @_ln_reduce_kernel(%arg0: i32, %arg1: i32, %arg2: memref<2x4x256xf32, #tpu.memory_space<vmem>>, %arg3: memref<1x4x1xf32, #tpu.memory_space<vmem>>, %arg4: memref<1x4x1xf32, #tpu.memory_space<vmem>>, %arg5: memref<2x4x256xf32, #tpu.memory_space<vmem>>) attributes {dimension_semantics = [#tpu.dimension_semantics<parallel>, #tpu.dimension_semantics<parallel>], iteration_bounds = array<i64: 1, 1>, scalar_prefetch = 0 : i64, scratch_operands = 0 : i64, tpu.core_type = #tpu.core_type<tc>, window_params = [{transform_indices = @transform_0, window_bounds = array<i64: 2, 4, 256>}, {pipeline_mode = #tpu.pipeline_mode<synchronous>, transform_indices = @transform_1, window_bounds = array<i64: 1, 4, 1>}, {pipeline_mode = #tpu.pipeline_mode<synchronous>, transform_indices = @transform_2, window_bounds = array<i64: 1, 4, 1>}, {transform_indices = @transform_3, window_bounds = array<i64: 2, 4, 256>}]} {
    %c0 = arith.constant 0 : index
    %c0_0 = arith.constant 0 : index
    %c0_1 = arith.constant 0 : index
    %0 = vector.load %arg2[%c0, %c0_0, %c0_1] : memref<2x4x256xf32, #tpu.memory_space<vmem>>, vector<2x4x256xf32>
    %cst = arith.constant dense<0.000000e+00> : vector<2x256xf32>
    %1 = vector.multi_reduction <add>, %0, %cst [1] : vector<2x4x256xf32> to vector<2x256xf32>
    %2 = vector.shape_cast %1 : vector<2x256xf32> to vector<2x1x256xf32>
    %cst_2 = arith.constant 2.500000e-01 : f32
    %3 = vector.broadcast %cst_2 : f32 to vector<2x1x256xf32>
    %4 = arith.mulf %2, %3 : vector<2x1x256xf32>
    %5 = arith.mulf %0, %0 : vector<2x4x256xf32>
    %cst_3 = arith.constant dense<0.000000e+00> : vector<2x256xf32>
    %6 = vector.multi_reduction <add>, %5, %cst_3 [1] : vector<2x4x256xf32> to vector<2x256xf32>
    %7 = vector.shape_cast %6 : vector<2x256xf32> to vector<2x1x256xf32>
    %cst_4 = arith.constant 2.500000e-01 : f32
    %8 = vector.broadcast %cst_4 : f32 to vector<2x1x256xf32>
    %9 = arith.mulf %7, %8 : vector<2x1x256xf32>
    %10 = arith.mulf %4, %4 : vector<2x1x256xf32>
    %11 = arith.subf %9, %10 : vector<2x1x256xf32>
    %cst_5 = arith.constant 0.000000e+00 : f32
    %12 = vector.broadcast %cst_5 : f32 to vector<2x1x256xf32>
    %13 = arith.maximumf %11, %12 : vector<2x1x256xf32>
    %cst_6 = arith.constant 9.99999997E-7 : f32
    %14 = vector.broadcast %cst_6 : f32 to vector<2x1x256xf32>
    %15 = arith.addf %13, %14 : vector<2x1x256xf32>
    %16 = math.rsqrt %15 : vector<2x1x256xf32>
    %17 = vector.broadcast %4 : vector<2x1x256xf32> to vector<2x4x256xf32>
    %18 = arith.subf %0, %17 : vector<2x4x256xf32>
    %19 = vector.broadcast %16 : vector<2x1x256xf32> to vector<2x4x256xf32>
    %20 = arith.mulf %18, %19 : vector<2x4x256xf32>
    %c0_7 = arith.constant 0 : index
    %c0_8 = arith.constant 0 : index
    %c0_9 = arith.constant 0 : index
    %21 = vector.load %arg3[%c0_7, %c0_8, %c0_9] : memref<1x4x1xf32, #tpu.memory_space<vmem>>, vector<1x4x1xf32>
    %22 = vector.broadcast %21 : vector<1x4x1xf32> to vector<2x4x256xf32>
    %23 = arith.mulf %20, %22 : vector<2x4x256xf32>
    %c0_10 = arith.constant 0 : index
    %c0_11 = arith.constant 0 : index
    %c0_12 = arith.constant 0 : index
    %24 = vector.load %arg4[%c0_10, %c0_11, %c0_12] : memref<1x4x1xf32, #tpu.memory_space<vmem>>, vector<1x4x1xf32>
    %25 = vector.broadcast %24 : vector<1x4x1xf32> to vector<2x4x256xf32>
    %26 = arith.addf %23, %25 : vector<2x4x256xf32>
    %c0_13 = arith.constant 0 : index
    %c0_14 = arith.constant 0 : index
    %c0_15 = arith.constant 0 : index
    %27 = vector.load %arg5[%c0_13, %c0_14, %c0_15] : memref<2x4x256xf32, #tpu.memory_space<vmem>>, vector<2x4x256xf32>
    tpu.vector_store %arg5[%c0_13, %c0_14, %c0_15], %26 {strides = array<i32>} : memref<2x4x256xf32, #tpu.memory_space<vmem>>, vector<2x4x256xf32>,
    return
  }
  func.func @transform_0(%arg0: i32, %arg1: i32) -> (i32, i32, i32) {
    %c0_i32 = arith.constant 0 : i32
    %c0_i32_0 = arith.constant 0 : i32
    return %arg0, %c0_i32, %arg1 : i32, i32, i32
  }
  func.func @transform_1(%arg0: i32, %arg1: i32) -> (i32, i32, i32) {
    %c0_i32 = arith.constant 0 : i32
    %c0_i32_0 = arith.constant 0 : i32
    %c0_i32_1 = arith.constant 0 : i32
    %c0_i32_2 = arith.constant 0 : i32
    return %c0_i32, %c0_i32_0, %c0_i32_1 : i32, i32, i32
  }
  func.func @transform_2(%arg0: i32, %arg1: i32) -> (i32, i32, i32) {
    %c0_i32 = arith.constant 0 : i32
    %c0_i32_0 = arith.constant 0 : i32
    %c0_i32_1 = arith.constant 0 : i32
    %c0_i32_2 = arith.constant 0 : i32
    return %c0_i32, %c0_i32_0, %c0_i32_1 : i32, i32, i32
  }
  func.func @transform_3(%arg0: i32, %arg1: i32) -> (i32, i32, i32) {
    %c0_i32 = arith.constant 0 : i32
    %c0_i32_0 = arith.constant 0 : i32
    return %arg0, %c0_i32, %arg1 : i32, i32, i32
  }
}

</mosaic_0001>

<llo_original>
// kernel: tpu_custom_call.1
$region0: #{tpu_custom_call.1}
  #allocation0 [shape = 'u32[]', space=smem, size = 0x4, offset = 0x4, fixed_abs, tag = 'smem constant byte address 0x4 - core index']
  #allocation1 [shape = 'u32[144,128]{1,0:T(1,128)}', space=vmem, size = 0x12000, scoped, tag = 'internal scratch']
  %s0 = inlined_call_operand.hbm [shape: f32[2,4,256], index: 0, kind: input, shape index: {}]
  %s1 = inlined_call_operand.vmem [shape: f32[1,4,1], index: 1, kind: input, shape index: {}]
  %s2 = inlined_call_operand.vmem [shape: f32[1,4,1], index: 2, kind: input, shape index: {}]
  %s3 = inlined_call_operand.hbm [shape: f32[2,4,256], index: 3, kind: output, shape index: {}]
  %s4 = sld [smem:[#allocation0]]
  $region26: #{tpu_custom_call.1} parent=0
    _
  %s6 = ssub.s32 1, %s4
  %s7 = scalar_select 0, %s6, %s4
  $region1: #{tpu_custom_call.1} parent=0
    #allocation2 [shape = 'u8[8192]{0}', space=vmem, size = 0x2000, scoped, tag = 'input window, operand 0, single buffered']
    #allocation3 [shape = 's32[1]{0}', space=sflag, size = 0x4, scoped, tag = 'scoped memory for tpu_custom_call.1']
    #allocation4 [shape = 's32[1]{0}', space=sflag, size = 0x4, scoped, tag = 'scoped memory for tpu_custom_call.1']
    #allocation5 [shape = 'u8[8192]{0}', space=vmem, size = 0x2000, scoped, tag = 'output window, operand 0, single buffered']
    %8 = vsyncpa [#allocation3], 0
    %9 = vsyncpa [#allocation4], 0
    // Predicated region
    $region2: #{tpu_custom_call.1} parent=1 // pred_check
      _
    $region3: #{tpu_custom_call.1} parent=1 // pred_check_branch
      %11 = sbr.rel (0) target = $region5
    $region4: #{tpu_custom_call.1} parent=1 // pred_region
      %s13 = ssub.s32 256, 256
      %14 = vsyncadd [#allocation3], %s13
      %s15 = sshll.u32 [#allocation2], 4
      %s16 = int_to_ptr.vmem [resolvable:$true] %s15
      %21 = dma.hbm_to_vmem [thread:$0]  %s0, 256, %s16, [#allocation3], 128, 128, 8
    $region5: #{tpu_custom_call.1} parent=1 // pred_fallthru
      _
    // Predicated region
    $region6: #{tpu_custom_call.1} parent=1 // pred_check
      _
    $region7: #{tpu_custom_call.1} parent=1 // pred_check_branch
      %23 = sbr.rel (0) target = $region9
    $region8: #{tpu_custom_call.1} parent=1 // pred_region
      _
    $region9: #{tpu_custom_call.1} parent=1 // pred_fallthru
      _
    // Predicated region
    $region10: #{tpu_custom_call.1} parent=1 // pred_check
      _
    $region11: #{tpu_custom_call.1} parent=1 // pred_check_branch
      %25 = sbr.rel (0) target = $region13
    $region12: #{tpu_custom_call.1} parent=1 // pred_region
      _
    $region13: #{tpu_custom_call.1} parent=1 // pred_fallthru
      _
    // Predicated region
    $region14: #{tpu_custom_call.1} parent=1 // pred_check
      _
    $region15: #{tpu_custom_call.1} parent=1 // pred_check_branch
      %27 = sbr.rel (0) target = $region17
    $region16: #{tpu_custom_call.1} parent=1 // pred_region
      %28 = dma.done [#allocation3], 256
    $region17: #{tpu_custom_call.1} parent=1 // pred_fallthru
      _
    %v29 = vld [vmem:[#allocation2] sm:$0xff]
    %v30 = vld [vmem:[#allocation2 + $0x8] sm:$0xff]
    %v33 = vcombine.high %v29, %v29
    %v34 = vcombine.high %v30, %v30
    %vm37 = vcmask 1043456
    %v38 = vsel %vm37, %v29, 0.0
    %v39 = vrot.slane %v38, 4
    %v40 = vadd.f32 %v38, %v39
    %v41 = vrot.slane %v40, 2
    %v42 = vadd.f32 %v40, %v41
    %v43 = vrot.slane %v42, 1
    %v44 = vadd.f32 %v42, %v43
    %v45 = vsel %vm37, %v33, 0.0
    %v46 = vrot.slane %v45, 4
    %v47 = vadd.f32 %v45, %v46
    %v48 = vrot.slane %v47, 2
    %v49 = vadd.f32 %v47, %v48
    %v50 = vrot.slane %v49, 1
    %v51 = vadd.f32 %v49, %v50
    %v52 = vsel %vm37, %v30, 0.0
    %v53 = vrot.slane %v52, 4
    %v54 = vadd.f32 %v52, %v53
    %v55 = vrot.slane %v54, 2
    %v56 = vadd.f32 %v54, %v55
    %v57 = vrot.slane %v56, 1
    %v58 = vadd.f32 %v56, %v57
    %v59 = vsel %vm37, %v34, 0.0
    %v60 = vrot.slane %v59, 4
    %v61 = vadd.f32 %v59, %v60
    %v62 = vrot.slane %v61, 2
    %v63 = vadd.f32 %v61, %v62
    %v64 = vrot.slane %v63, 1
    %v65 = vadd.f32 %v63, %v64
    %v66 = vmul.f32 %v44, 0.25
    %v67 = vmul.f32 %v51, 0.25
    %v68 = vmul.f32 %v58, 0.25
    %v69 = vmul.f32 %v65, 0.25
    %v70 = vmul.f32 %v29, %v29
    %v71 = vmul.f32 %v30, %v30
    %v74 = vcombine.high %v70, %v70
    %v75 = vcombine.high %v71, %v71
    %v78 = vsel %vm37, %v70, 0.0
    %v79 = vrot.slane %v78, 4
    %v80 = vadd.f32 %v78, %v79
    %v81 = vrot.slane %v80, 2
    %v82 = vadd.f32 %v80, %v81
    %v83 = vrot.slane %v82, 1
    %v84 = vadd.f32 %v82, %v83
    %v85 = vsel %vm37, %v74, 0.0
    %v86 = vrot.slane %v85, 4
    %v87 = vadd.f32 %v85, %v86
    %v88 = vrot.slane %v87, 2
    %v89 = vadd.f32 %v87, %v88
    %v90 = vrot.slane %v89, 1
    %v91 = vadd.f32 %v89, %v90
    %v92 = vsel %vm37, %v71, 0.0
    %v93 = vrot.slane %v92, 4
    %v94 = vadd.f32 %v92, %v93
    %v95 = vrot.slane %v94, 2
    %v96 = vadd.f32 %v94, %v95
    %v97 = vrot.slane %v96, 1
    %v98 = vadd.f32 %v96, %v97
    %v99 = vsel %vm37, %v75, 0.0
    %v100 = vrot.slane %v99, 4
    %v101 = vadd.f32 %v99, %v100
    %v102 = vrot.slane %v101, 2
    %v103 = vadd.f32 %v101, %v102
    %v104 = vrot.slane %v103, 1
    %v105 = vadd.f32 %v103, %v104
    %v106 = vmul.f32 %v84, 0.25
    %v107 = vmul.f32 %v91, 0.25
    %v108 = vmul.f32 %v98, 0.25
    %v109 = vmul.f32 %v105, 0.25
    %v110 = vmul.f32 %v66, %v66
    %v111 = vmul.f32 %v67, %v67
    %v112 = vmul.f32 %v68, %v68
    %v113 = vmul.f32 %v69, %v69
    %v114 = vsub.f32 %v106, %v110
    %v115 = vsub.f32 %v107, %v111
    %v116 = vsub.f32 %v108, %v112
    %v117 = vsub.f32 %v109, %v113
    %v118 = vmax.f32 %v114, 0.0
    %v119 = vmax.f32 %v115, 0.0
    %v120 = vmax.f32 %v116, 0.0
    %v121 = vmax.f32 %v117, 0.0
    %v122 = vadd.f32 %v118, 1e-06
    %v123 = vadd.f32 %v119, 1e-06
    %v124 = vadd.f32 %v120, 1e-06
    %v125 = vadd.f32 %v121, 1e-06
    %v126 = vrsqrt.pop %v122
    %v127 = vrsqrt.pop %v123
    %v128 = vrsqrt.pop %v124
    %v129 = vrsqrt.pop %v125
    %v134 = vcombine.low %v66, %v67
    %v135 = vcombine.low %v68, %v69
    %v138 = vsub.f32 %v29, %v134
    %v139 = vsub.f32 %v30, %v135
    %v144 = vcombine.low %v126, %v127
    %v145 = vcombine.low %v128, %v129
    %v148 = vmul.f32 %v138, %v144
    %v149 = vmul.f32 %v139, %v145
    %v150 = vld [vmem:[%s1] sm:$0xf]
    %152 = vset.pattern.permute.xlu0 0
    %153 = vperm.xlu0 %152, %v150
    %v154 = vpop.permute.xlu0 %153
    %v156 = vunpack.c.l.s4 839922192
    %v157 = vunpack.c.0.s8 %v156
    %v158 = vlaneseq
    %v159 = vshrl.u32 %v158, 7
    %v160 = vsub.s32 %v157, %v159
    %v161 = vrot.slane %v154, %v160
    %v163 = vmul.f32 %v148, %v161
    %v164 = vmul.f32 %v149, %v161
    %v165 = vld [vmem:[%s2] sm:$0xf]
    %167 = vset.pattern.permute.xlu0 0
    %168 = vperm.xlu0 %167, %v165
    %v169 = vpop.permute.xlu0 %168
    %v171 = vunpack.c.l.s4 839922192
    %v172 = vunpack.c.0.s8 %v171
    %v173 = vlaneseq
    %v174 = vshrl.u32 %v173, 7
    %v175 = vsub.s32 %v172, %v174
    %v176 = vrot.slane %v169, %v175
    %v178 = vadd.f32 %v163, %v176
    %v179 = vadd.f32 %v164, %v176
    %180 = vst [vmem:[#allocation5] sm:$0xff] %v178
    %181 = vst [vmem:[#allocation5 + $0x8] sm:$0xff] %v179
    // Predicated region
    $region18: #{tpu_custom_call.1} parent=1 // pred_check
      _
    $region19: #{tpu_custom_call.1} parent=1 // pred_check_branch
      %183 = sbr.rel (0) target = $region21
    $region20: #{tpu_custom_call.1} parent=1 // pred_region
      %s185 = ssub.s32 256, 256
      %186 = vsyncadd [#allocation4], %s185
      %s187 = sshll.u32 [#allocation5], 4
      %s188 = int_to_ptr.vmem [resolvable:$true] %s187
      %193 = dma.vmem_to_hbm [thread:$0]  %s188, 256, %s3, [#allocation4], 128, 128, 8
    $region21: #{tpu_custom_call.1} parent=1 // pred_fallthru
      _
    // Predicated region
    $region22: #{tpu_custom_call.1} parent=1 // pred_check
      _
    $region23: #{tpu_custom_call.1} parent=1 // pred_check_branch
      %195 = sbr.rel (0) target = $region25
    $region24: #{tpu_custom_call.1} parent=1 // pred_region
      %196 = dma.done [#allocation4], 256
    $region25: #{tpu_custom_call.1} parent=1 // pred_fallthru
      _
    %197 = vsyncpa [#allocation3], 1
    %198 = vsyncpa [#allocation4], 1

</llo_original>
